<compile_context>
chip_gen: v5e
topology: v5e:2x2
jax: 0.10.0
libtpu: 0.0.40
codegen_flags: <defaults>
</compile_context>

<pallas_src>
import jax
import jax.numpy as jnp
from jax.experimental import pallas as pl
from jax.experimental.pallas import tpu as pltpu

_HIDDEN = 128      # ad_layer1 output width
_N_OUT = 2         # ad_layer2 output width (domain logits)


def _adv_net_kernel(x_ref, w1_ref, b1_ref, w2_ref, b2_ref, o_ref):
    # ad_layer1: x @ W1  (MXU, f32 accumulation regardless of storage dtype)
    h = jnp.dot(x_ref[...], w1_ref[...], preferred_element_type=jnp.float32)
    # bias + ReLU on the VPU in f32 (v5e has no bf16 VALU path)
    h = jnp.maximum(h + b1_ref[...], 0.0)
    # dropout1: nn.Dropout(0.5) is identity at inference.
    # TODO(synk): training-mode dropout (stochastic mask + 2x scaling) not emitted.
    h = h.astype(w2_ref.dtype)
    # ad_layer2: h @ W2 + b2 -> only the real n_out logits are stored (slim writeback)
    out = jnp.dot(h, w2_ref[...], preferred_element_type=jnp.float32) + b2_ref[...]
    o_ref[...] = out.astype(o_ref.dtype)


def _round_up(x, m):
    return ((x + m - 1) // m) * m


def prepare_params(w1, b1, w2, b2, *, mxu_dtype=None):
    """Per-model (not per-call) parameter prep.

    Casts the two MXU weight operands once if a reduced-precision HBM storage
    dtype (e.g. jnp.bfloat16) is requested; biases stay f32 so the VPU
    epilogue is exact.  NOTE: the bf16 path trades precision for bandwidth.
    """
    if mxu_dtype is not None:
        w1 = w1.astype(mxu_dtype)
        w2 = w2.astype(mxu_dtype)
    return (w1, b1.astype(jnp.float32), w2, b2.astype(jnp.float32))


def adversarial_network(x, params, *, block_b=1024, x_buffers=None):
    """AdversarialNetwork forward (eval mode): ReLU(x @ W1 + b1) @ W2 + b2.

    x: (B, F).  params = prepare_params(w1, b1, w2, b2) with
      w1: (F, 128), b1: (1, 128), w2: (128, 2), b2: (1, 2).
    Returns logits of shape (B, 2), f32.
    """
    w1, b1, w2, b2 = params
    B, F = x.shape
    n_out = w2.shape[1]

    # Store the streamed x in the weights' dtype (bf16 storage halves the
    # dominant HBM read when prepare_params(mxu_dtype=bf16) was used).
    if x.dtype != w1.dtype:
        x = x.astype(w1.dtype)

    # Batch tile: as large as useful (per-step-overhead amortization / HBM
    # roofline) while respecting the sublane minimum of the stored dtype.
    itemsize = jnp.dtype(x.dtype).itemsize
    min_sublane = {2: 16, 1: 32}.get(itemsize, 8)
    tm = min(block_b, _round_up(max(B, 1), min_sublane))
    # Ragged final block: Pallas masks out-of-bounds output rows, so no
    # wrapper-side padding copy of x is needed.
    grid = (pl.cdiv(B, tm),)

    x_spec_kwargs = {}
    if x_buffers is not None:
        # Deeper buffering on the only streaming input, if DMA is still exposed.
        x_spec_kwargs["pipeline_mode"] = pl.Buffered(x_buffers)

    flops = 2 * B * (F * _HIDDEN + _HIDDEN * n_out)
    bytes_accessed = (
        itemsize * (B * F + F * _HIDDEN + _HIDDEN * n_out)   # x + weights
        + 4 * (_HIDDEN + n_out)                               # biases (f32)
        + 4 * B * n_out                                       # output (f32)
    )

    out = pl.pallas_call(
        _adv_net_kernel,
        out_shape=jax.ShapeDtypeStruct((B, n_out), jnp.float32),
        grid=grid,
        in_specs=[
            pl.BlockSpec((tm, F), lambda i: (i, 0), **x_spec_kwargs),  # x: streamed over batch
            pl.BlockSpec((F, _HIDDEN), lambda i: (0, 0)),              # w1: VMEM-resident
            pl.BlockSpec((1, _HIDDEN), lambda i: (0, 0)),              # b1
            pl.BlockSpec((_HIDDEN, n_out), lambda i: (0, 0)),          # w2
            pl.BlockSpec((1, n_out), lambda i: (0, 0)),                # b2
        ],
        out_specs=pl.BlockSpec((tm, n_out), lambda i: (i, 0)),
        compiler_params=pltpu.CompilerParams(
            dimension_semantics=("parallel",),
        ),
        cost_estimate=pl.CostEstimate(
            flops=flops, transcendentals=0, bytes_accessed=bytes_accessed
        ),
    )(x, w1, b1, w2, b2)
    return out


def init_params(key, in_feature, hidden=_HIDDEN, out_dim=_N_OUT, dtype=jnp.float32):
    """Deterministic init mimicking torch.nn.Linear defaults
    (uniform(-1/sqrt(fan_in), 1/sqrt(fan_in))).  Weights stored pre-transposed
    relative to PyTorch's (out, in) layout."""
    k1, k2, k3, k4 = jax.random.split(key, 4)
    bound1 = 1.0 / jnp.sqrt(in_feature)
    bound2 = 1.0 / jnp.sqrt(hidden)
    w1 = jax.random.uniform(k1, (in_feature, hidden), dtype, -bound1, bound1)
    b1 = jax.random.uniform(k2, (1, hidden), dtype, -bound1, bound1)
    w2 = jax.random.uniform(k3, (hidden, out_dim), dtype, -bound2, bound2)
    b2 = jax.random.uniform(k4, (1, out_dim), dtype, -bound2, bound2)
    return w1, b1, w2, b2


if __name__ == "__main__":
    key = jax.random.PRNGKey(0)
    kx, kp, kx2 = jax.random.split(key, 3)

    in_feature = 256   # M18 uses AdversarialNetwork(in_feature=256)

    w1, b1, w2, b2 = init_params(kp, in_feature)
    params_f32 = prepare_params(w1, b1, w2, b2)

    def ref_fn(xx):
        return jnp.maximum(xx @ w1 + b1, 0.0) @ w2 + b2

    # --- small batch (M18 head regime): single tile, exact f32 path ---
    B = 8
    x = jax.random.normal(kx, (B, in_feature), jnp.float32)
    out = jax.block_until_ready(adversarial_network(x, params_f32))
    assert out.shape == (B, _N_OUT)
    assert jnp.allclose(out, ref_fn(x), atol=1e-5, rtol=1e-5)

    # --- ragged multi-step grid (exercises pl.cdiv masking, no x pad copy) ---
    B2 = 24
    x2 = jax.random.normal(kx2, (B2, in_feature), jnp.float32)
    out2 = jax.block_until_ready(adversarial_network(x2, params_f32, block_b=16))
    assert out2.shape == (B2, _N_OUT)
    assert jnp.allclose(out2, ref_fn(x2), atol=1e-5, rtol=1e-5)

    # --- bf16 HBM storage of x / weights (bandwidth-bound path), f32 epilogue ---
    B3 = 32
    x3 = jax.random.normal(kx2, (B3, in_feature), jnp.float32)
    params_bf16 = prepare_params(w1, b1, w2, b2, mxu_dtype=jnp.bfloat16)
    out3 = jax.block_until_ready(adversarial_network(x3, params_bf16, block_b=16))
    assert out3.shape == (B3, _N_OUT)
    assert jnp.allclose(out3, ref_fn(x3), atol=5e-2, rtol=5e-2)

    print("KERNEL_OK")
</pallas_src>

<mosaic_0001>
module attributes {stable_mosaic.version = 11 : i64} {
  func.func @_adv_net_kernel(%arg0: i32, %arg1: memref<8x256xf32, #tpu.memory_space<vmem>>, %arg2: memref<256x128xf32, #tpu.memory_space<vmem>>, %arg3: memref<1x128xf32, #tpu.memory_space<vmem>>, %arg4: memref<128x2xf32, #tpu.memory_space<vmem>>, %arg5: memref<1x2xf32, #tpu.memory_space<vmem>>, %arg6: memref<8x2xf32, #tpu.memory_space<vmem>>) attributes {dimension_semantics = [#tpu.dimension_semantics<parallel>], iteration_bounds = array<i64: 1>, scalar_prefetch = 0 : i64, scratch_operands = 0 : i64, tpu.core_type = #tpu.core_type<tc>, window_params = [{transform_indices = @transform_0, window_bounds = array<i64: 8, 256>}, {pipeline_mode = #tpu.pipeline_mode<synchronous>, transform_indices = @transform_1, window_bounds = array<i64: 256, 128>}, {pipeline_mode = #tpu.pipeline_mode<synchronous>, transform_indices = @transform_2, window_bounds = array<i64: 1, 128>}, {pipeline_mode = #tpu.pipeline_mode<synchronous>, transform_indices = @transform_3, window_bounds = array<i64: 128, 2>}, {pipeline_mode = #tpu.pipeline_mode<synchronous>, transform_indices = @transform_4, window_bounds = array<i64: 1, 2>}, {transform_indices = @transform_5, window_bounds = array<i64: 8, 2>}]} {
    %c0 = arith.constant 0 : index
    %c0_0 = arith.constant 0 : index
    %0 = vector.load %arg1[%c0, %c0_0] : memref<8x256xf32, #tpu.memory_space<vmem>>, vector<8x256xf32>
    %c0_1 = arith.constant 0 : index
    %c0_2 = arith.constant 0 : index
    %1 = vector.load %arg2[%c0_1, %c0_2] : memref<256x128xf32, #tpu.memory_space<vmem>>, vector<256x128xf32>
    %cst = arith.constant dense<0.000000e+00> : vector<8x128xf32>
    %2 = tpu.matmul %0, %1, %cst {dimension_numbers = #tpu.dot_dimension_numbers<[1], [0], [0], [1], [0, 0, 1, 1], [], []>} : vector<8x256xf32>, vector<256x128xf32>, vector<8x128xf32> -> vector<8x128xf32>
    %c0_3 = arith.constant 0 : index
    %c0_4 = arith.constant 0 : index
    %3 = vector.load %arg3[%c0_3, %c0_4] : memref<1x128xf32, #tpu.memory_space<vmem>>, vector<1x128xf32>
    %4 = vector.broadcast %3 : vector<1x128xf32> to vector<8x128xf32>
    %5 = arith.addf %2, %4 : vector<8x128xf32>
    %cst_5 = arith.constant 0.000000e+00 : f32
    %6 = vector.broadcast %cst_5 : f32 to vector<8x128xf32>
    %7 = arith.maximumf %5, %6 : vector<8x128xf32>
    %c0_6 = arith.constant 0 : index
    %c0_7 = arith.constant 0 : index
    %8 = vector.load %arg4[%c0_6, %c0_7] : memref<128x2xf32, #tpu.memory_space<vmem>>, vector<128x2xf32>
    %cst_8 = arith.constant dense<0.000000e+00> : vector<8x2xf32>
    %9 = tpu.matmul %7, %8, %cst_8 {dimension_numbers = #tpu.dot_dimension_numbers<[1], [0], [0], [1], [0, 0, 1, 1], [], []>} : vector<8x128xf32>, vector<128x2xf32>, vector<8x2xf32> -> vector<8x2xf32>
    %c0_9 = arith.constant 0 : index
    %c0_10 = arith.constant 0 : index
    %10 = vector.load %arg5[%c0_9, %c0_10] : memref<1x2xf32, #tpu.memory_space<vmem>>, vector<1x2xf32>
    %11 = vector.broadcast %10 : vector<1x2xf32> to vector<8x2xf32>
    %12 = arith.addf %9, %11 : vector<8x2xf32>
    %c0_11 = arith.constant 0 : index
    %c0_12 = arith.constant 0 : index
    %13 = vector.load %arg6[%c0_11, %c0_12] : memref<8x2xf32, #tpu.memory_space<vmem>>, vector<8x2xf32>
    tpu.vector_store %arg6[%c0_11, %c0_12], %12 {strides = array<i32>} : memref<8x2xf32, #tpu.memory_space<vmem>>, vector<8x2xf32>,
    return
  }
  func.func @transform_0(%arg0: i32) -> (i32, i32) {
    %c0_i32 = arith.constant 0 : i32
    %c0_i32_0 = arith.constant 0 : i32
    return %arg0, %c0_i32 : i32, i32
  }
  func.func @transform_1(%arg0: i32) -> (i32, i32) {
    %c0_i32 = arith.constant 0 : i32
    %c0_i32_0 = arith.constant 0 : i32
    %c0_i32_1 = arith.constant 0 : i32
    return %c0_i32, %c0_i32_0 : i32, i32
  }
  func.func @transform_2(%arg0: i32) -> (i32, i32) {
    %c0_i32 = arith.constant 0 : i32
    %c0_i32_0 = arith.constant 0 : i32
    %c0_i32_1 = arith.constant 0 : i32
    return %c0_i32, %c0_i32_0 : i32, i32
  }
  func.func @transform_3(%arg0: i32) -> (i32, i32) {
    %c0_i32 = arith.constant 0 : i32
    %c0_i32_0 = arith.constant 0 : i32
    %c0_i32_1 = arith.constant 0 : i32
    return %c0_i32, %c0_i32_0 : i32, i32
  }
  func.func @transform_4(%arg0: i32) -> (i32, i32) {
    %c0_i32 = arith.constant 0 : i32
    %c0_i32_0 = arith.constant 0 : i32
    %c0_i32_1 = arith.constant 0 : i32
    return %c0_i32, %c0_i32_0 : i32, i32
  }
  func.func @transform_5(%arg0: i32) -> (i32, i32) {
    %c0_i32 = arith.constant 0 : i32
    %c0_i32_0 = arith.constant 0 : i32
    return %arg0, %c0_i32 : i32, i32
  }
}

</mosaic_0001>

<llo_original>
// kernel: tpu_custom_call.1
$region0: #{tpu_custom_call.1}
  #allocation0 [shape = 'u32[]', space=smem, size = 0x4, offset = 0x4, fixed_abs, tag = 'smem constant byte address 0x4 - core index']
  #allocation1 [shape = 'u32[72,128]{1,0:T(1,128)}', space=vmem, size = 0x9000, scoped, tag = 'internal scratch']
  %s0 = inlined_call_operand.vmem [shape: f32[8,256], index: 0, kind: input, shape index: {}]
  %s1 = inlined_call_operand.hbm [shape: f32[256,128], index: 1, kind: input, shape index: {}]
  %s2 = inlined_call_operand.vmem [shape: f32[1,128], index: 2, kind: input, shape index: {}]
  %s3 = inlined_call_operand.vmem [shape: f32[128,2], index: 3, kind: input, shape index: {}]
  %s4 = inlined_call_operand.vmem [shape: f32[1,2], index: 4, kind: input, shape index: {}]
  %s5 = inlined_call_operand.vmem [shape: f32[8,2], index: 5, kind: output, shape index: {}]
  %s6 = sld [smem:[#allocation0]]
  $region34: #{tpu_custom_call.1} parent=0
    _
  %s8 = ssub.s32 1, %s6
  %s9 = scalar_select 0, %s8, %s6
  $region1: #{tpu_custom_call.1} parent=0
    #allocation2 [shape = 'u8[131072]{0}', space=vmem, size = 0x20000, scoped, tag = 'input window, operand 1, single buffered']
    #allocation3 [shape = 's32[1]{0}', space=sflag, size = 0x4, scoped, tag = 'scoped memory for tpu_custom_call.1']
    %10 = vsyncpa [#allocation3], 0
    // Predicated region
    $region2: #{tpu_custom_call.1} parent=1 // pred_check
      _
    $region3: #{tpu_custom_call.1} parent=1 // pred_check_branch
      %12 = sbr.rel (0) target = $region5
    $region4: #{tpu_custom_call.1} parent=1 // pred_region
      _
    $region5: #{tpu_custom_call.1} parent=1 // pred_fallthru
      _
    // Predicated region
    $region6: #{tpu_custom_call.1} parent=1 // pred_check
      _
    $region7: #{tpu_custom_call.1} parent=1 // pred_check_branch
      %14 = sbr.rel (0) target = $region9
    $region8: #{tpu_custom_call.1} parent=1 // pred_region
      %16 = vsyncadd [#allocation3], 0
      %s17 = sshll.u32 %s1, 4
      %s18 = int_to_ptr.hbm [resolvable:$true] %s17
      %s19 = sshll.u32 [#allocation2], 4
      %s20 = int_to_ptr.vmem [resolvable:$true] %s19
      %25 = dma.hbm_to_vmem [thread:$0]  %s18, 4096, %s20, [#allocation3], 128, 128, 8
    $region9: #{tpu_custom_call.1} parent=1 // pred_fallthru
      _
    // Predicated region
    $region10: #{tpu_custom_call.1} parent=1 // pred_check
      _
    $region11: #{tpu_custom_call.1} parent=1 // pred_check_branch
      %27 = sbr.rel (0) target = $region13
    $region12: #{tpu_custom_call.1} parent=1 // pred_region
      _
    $region13: #{tpu_custom_call.1} parent=1 // pred_fallthru
      _
    // Predicated region
    $region14: #{tpu_custom_call.1} parent=1 // pred_check
      _
    $region15: #{tpu_custom_call.1} parent=1 // pred_check_branch
      %29 = sbr.rel (0) target = $region17
    $region16: #{tpu_custom_call.1} parent=1 // pred_region
      _
    $region17: #{tpu_custom_call.1} parent=1 // pred_fallthru
      _
    // Predicated region
    $region18: #{tpu_custom_call.1} parent=1 // pred_check
      _
    $region19: #{tpu_custom_call.1} parent=1 // pred_check_branch
      %31 = sbr.rel (0) target = $region21
    $region20: #{tpu_custom_call.1} parent=1 // pred_region
      _
    $region21: #{tpu_custom_call.1} parent=1 // pred_fallthru
      _
    // Predicated region
    $region22: #{tpu_custom_call.1} parent=1 // pred_check
      _
    $region23: #{tpu_custom_call.1} parent=1 // pred_check_branch
      %33 = sbr.rel (0) target = $region25
    $region24: #{tpu_custom_call.1} parent=1 // pred_region
      %35 = dma.done [#allocation3], 4096
    $region25: #{tpu_custom_call.1} parent=1 // pred_fallthru
      _
    %v36 = vld [vmem:[%s0] sm:$0xff]
    %v37 = vld [vmem:[%s0 + $0x8] sm:$0xff]
    %v38 = vld [vmem:[#allocation2] sm:$0xff]
    %v39 = vld [vmem:[#allocation2 + $0x8] sm:$0xff]
    %v40 = vld [vmem:[#allocation2 + $0x10] sm:$0xff]
    %v41 = vld [vmem:[#allocation2 + $0x18] sm:$0xff]
    %v42 = vld [vmem:[#allocation2 + $0x20] sm:$0xff]
    %v43 = vld [vmem:[#allocation2 + $0x28] sm:$0xff]
    %v44 = vld [vmem:[#allocation2 + $0x30] sm:$0xff]
    %v45 = vld [vmem:[#allocation2 + $0x38] sm:$0xff]
    %v46 = vld [vmem:[#allocation2 + $0x40] sm:$0xff]
    %v47 = vld [vmem:[#allocation2 + $0x48] sm:$0xff]
    %v48 = vld [vmem:[#allocation2 + $0x50] sm:$0xff]
    %v49 = vld [vmem:[#allocation2 + $0x58] sm:$0xff]
    %v50 = vld [vmem:[#allocation2 + $0x60] sm:$0xff]
    %v51 = vld [vmem:[#allocation2 + $0x68] sm:$0xff]
    %v52 = vld [vmem:[#allocation2 + $0x70] sm:$0xff]
    %v53 = vld [vmem:[#allocation2 + $0x78] sm:$0xff]
    %v54 = vld [vmem:[#allocation2 + $0x80] sm:$0xff]
    %v55 = vld [vmem:[#allocation2 + $0x88] sm:$0xff]
    %v56 = vld [vmem:[#allocation2 + $0x90] sm:$0xff]
    %v57 = vld [vmem:[#allocation2 + $0x98] sm:$0xff]
    %v58 = vld [vmem:[#allocation2 + $0xa0] sm:$0xff]
    %v59 = vld [vmem:[#allocation2 + $0xa8] sm:$0xff]
    %v60 = vld [vmem:[#allocation2 + $0xb0] sm:$0xff]
    %v61 = vld [vmem:[#allocation2 + $0xb8] sm:$0xff]
    %v62 = vld [vmem:[#allocation2 + $0xc0] sm:$0xff]
    %v63 = vld [vmem:[#allocation2 + $0xc8] sm:$0xff]
    %v64 = vld [vmem:[#allocation2 + $0xd0] sm:$0xff]
    %v65 = vld [vmem:[#allocation2 + $0xd8] sm:$0xff]
    %v66 = vld [vmem:[#allocation2 + $0xe0] sm:$0xff]
    %v67 = vld [vmem:[#allocation2 + $0xe8] sm:$0xff]
    %v68 = vld [vmem:[#allocation2 + $0xf0] sm:$0xff]
    %v69 = vld [vmem:[#allocation2 + $0xf8] sm:$0xff]
    %v70 = vld [vmem:[%s2] sm:$0x1]
    %v72 = vperm.slane %v70, 0
    %74 = vmatpush.msra.mxu0 %v53
    %75 = vmatpush.msra.mxu0 %v52
    %76 = vmatpush.msra.mxu0 %v51
    %77 = vmatpush.msra.mxu0 %v50
    %78 = vmatpush.msra.mxu0 %v49
    %79 = vmatpush.msra.mxu0 %v48
    %80 = vmatpush.msra.mxu0 %v47
    %81 = vmatpush.msra.mxu0 %v46
    %82 = vmatpush.msra.mxu0 %v45
    %83 = vmatpush.msra.mxu0 %v44
    %84 = vmatpush.msra.mxu0 %v43
    %85 = vmatpush.msra.mxu0 %v42
    %86 = vmatpush.msra.mxu0 %v41
    %87 = vmatpush.msra.mxu0 %v40
    %88 = vmatpush.msra.mxu0 %v39
    %89 = vmatpush.msra.mxu0 %v38
    %90 = vmatmul.f32.gmra.mxu0 %v36
    %v91 = vpop.f32.mrf.mxu0
    %v92 = vadd.f32 %v72, %v91
    %93 = vdwg.mxu0
    %94 = vmatpush.msra.mxu0 %v69
    %95 = vmatpush.msra.mxu0 %v68
    %96 = vmatpush.msra.mxu0 %v67
    %97 = vmatpush.msra.mxu0 %v66
    %98 = vmatpush.msra.mxu0 %v65
    %99 = vmatpush.msra.mxu0 %v64
    %100 = vmatpush.msra.mxu0 %v63
    %101 = vmatpush.msra.mxu0 %v62
    %102 = vmatpush.msra.mxu0 %v61
    %103 = vmatpush.msra.mxu0 %v60
    %104 = vmatpush.msra.mxu0 %v59
    %105 = vmatpush.msra.mxu0 %v58
    %106 = vmatpush.msra.mxu0 %v57
    %107 = vmatpush.msra.mxu0 %v56
    %108 = vmatpush.msra.mxu0 %v55
    %109 = vmatpush.msra.mxu0 %v54
    %110 = vmatmul.f32.gmra.mxu0 %v37
    %v111 = vpop.f32.mrf.mxu0
    %v112 = vadd.f32 %v92, %v111
    %113 = vdwg.mxu0
    %v114 = vmax.f32 %v112, 0.0
    %v115 = vld [vmem:[%s3] sm:$0xff]
    %v116 = vld [vmem:[%s3 + $0x8] sm:$0xff]
    %v117 = vld [vmem:[%s3 + $0x10] sm:$0xff]
    %v118 = vld [vmem:[%s3 + $0x18] sm:$0xff]
    %v119 = vld [vmem:[%s3 + $0x20] sm:$0xff]
    %v120 = vld [vmem:[%s3 + $0x28] sm:$0xff]
    %v121 = vld [vmem:[%s3 + $0x30] sm:$0xff]
    %v122 = vld [vmem:[%s3 + $0x38] sm:$0xff]
    %v123 = vld [vmem:[%s3 + $0x40] sm:$0xff]
    %v124 = vld [vmem:[%s3 + $0x48] sm:$0xff]
    %v125 = vld [vmem:[%s3 + $0x50] sm:$0xff]
    %v126 = vld [vmem:[%s3 + $0x58] sm:$0xff]
    %v127 = vld [vmem:[%s3 + $0x60] sm:$0xff]
    %v128 = vld [vmem:[%s3 + $0x68] sm:$0xff]
    %v129 = vld [vmem:[%s3 + $0x70] sm:$0xff]
    %v130 = vld [vmem:[%s3 + $0x78] sm:$0xff]
    %v131 = vld [vmem:[%s4] sm:$0x1]
    %v133 = vperm.slane %v131, 0
    %135 = vmatpush.msra.mxu0 %v130
    %136 = vmatpush.msra.mxu0 %v129
    %137 = vmatpush.msra.mxu0 %v128
    %138 = vmatpush.msra.mxu0 %v127
    %139 = vmatpush.msra.mxu0 %v126
    %140 = vmatpush.msra.mxu0 %v125
    %141 = vmatpush.msra.mxu0 %v124
    %142 = vmatpush.msra.mxu0 %v123
    %143 = vmatpush.msra.mxu0 %v122
    %144 = vmatpush.msra.mxu0 %v121
    %145 = vmatpush.msra.mxu0 %v120
    %146 = vmatpush.msra.mxu0 %v119
    %147 = vmatpush.msra.mxu0 %v118
    %148 = vmatpush.msra.mxu0 %v117
    %149 = vmatpush.msra.mxu0 %v116
    %150 = vmatpush.msra.mxu0 %v115
    %151 = vmatmul.f32.gmra.mxu0 %v114
    %v152 = vpop.f32.mrf.mxu0
    %v153 = vadd.f32 %v133, %v152
    %154 = vdwg.mxu0
    %vm155 = vcmask 15360
    %156 = vst.msk [vmem:[%s5] sm:$0xff] %vm155, %v153
    // Predicated region
    $region26: #{tpu_custom_call.1} parent=1 // pred_check
      _
    $region27: #{tpu_custom_call.1} parent=1 // pred_check_branch
      %158 = sbr.rel (0) target = $region29
    $region28: #{tpu_custom_call.1} parent=1 // pred_region
      _
    $region29: #{tpu_custom_call.1} parent=1 // pred_fallthru
      _
    // Predicated region
    $region30: #{tpu_custom_call.1} parent=1 // pred_check
      _
    $region31: #{tpu_custom_call.1} parent=1 // pred_check_branch
      %160 = sbr.rel (0) target = $region33
    $region32: #{tpu_custom_call.1} parent=1 // pred_region
      _
    $region33: #{tpu_custom_call.1} parent=1 // pred_fallthru
      _
    %161 = vsyncpa [#allocation3], 1

</llo_original>
